<compile_context>
chip_gen: v7x
topology: tpu7x:2x2x1
jax: 0.10.0
libtpu: 0.0.40
codegen_flags: <defaults>
</compile_context>

<pallas_src>
import numpy as np
import jax
import jax.numpy as jnp
from jax.experimental import pallas as pl
from jax.experimental.pallas import tpu as pltpu


# ----------------------------------------------------------------------------
# Fused kernel: two ChebConv layers + bias + ReLU, one batch element per step.
#   h   = relu( sum_k (L_k @ x) @ W1_k + b1 )
#   out = relu( sum_k (L_k @ h) @ W2_k + b2 )
# L_ref holds all K+1 laplacians stacked along rows ([(K+1)*N, N]) so the
# graph-side product is a single MXU matmul per layer.
# ----------------------------------------------------------------------------
def _chebnet_fused_kernel(L_ref, x_ref, w1_ref, b1_ref, w2_ref, b2_ref, o_ref):
    _, N, _ = x_ref.shape          # x block: [1, N, C_in]
    K1 = w1_ref.shape[0]           # K + 1

    Ls = L_ref[...]                # [(K+1)*N, N], VMEM-resident across grid
    x = x_ref[0]                   # [N, C_in]

    def cheb_layer(inp, w_ref, b_ref):
        # One stacked matmul for all Chebyshev orders: [(K+1)*N, N] @ [N, C]
        z = jnp.dot(Ls, inp, preferred_element_type=jnp.float32)   # [(K+1)*N, C]
        # Statically unrolled reduction over k (K+1 is tiny and known).
        acc = jnp.dot(z[0:N], w_ref[0], preferred_element_type=jnp.float32)
        for k in range(1, K1):
            acc += jnp.dot(z[k * N:(k + 1) * N], w_ref[k],
                           preferred_element_type=jnp.float32)
        return jnp.maximum(acc + b_ref[...], 0.0)                  # [N, C_out]

    h = cheb_layer(x, w1_ref, b1_ref)                  # [N, hid_c], stays in VMEM
    o_ref[0] = cheb_layer(h, w2_ref, b2_ref).astype(o_ref.dtype)


def chebnet_fused(mul_L, x, w1, b1, w2, b2):
    """Fused two-layer ChebNet forward (without the final unsqueeze).

    mul_L: [K+1, N, N]        w1: [K+1, C_in, hid]   b1: [1, hid]
    x:     [B, N, C_in]       w2: [K+1, hid, out]    b2: [1, out]
    -> [B, N, out] float32
    """
    K1, N, _ = mul_L.shape
    B, _, C_in = x.shape
    hid_c = w1.shape[2]
    out_c = w2.shape[2]

    # Wrapper-side stacking: [(K+1)*N, N] so the kernel needs one matmul per
    # layer for the graph side.
    L_stacked = mul_L.reshape(K1 * N, N).astype(jnp.float32)

    # TODO(synk): on v7x, switch the batch axis to CORE_PARALLEL (or core_map)
    # once per-step work is non-trivial so the 2 TensorCores split B.
    return pl.pallas_call(
        _chebnet_fused_kernel,
        out_shape=jax.ShapeDtypeStruct((B, N, out_c), jnp.float32),
        grid_spec=pl.GridSpec(
            grid=(B,),
            in_specs=[
                # Constant index maps -> DMA'd once, resident for all b.
                pl.BlockSpec((K1 * N, N), lambda b: (0, 0)),         # L stacked
                pl.BlockSpec((1, N, C_in), lambda b: (b, 0, 0)),     # x[b]
                pl.BlockSpec((K1, C_in, hid_c), lambda b: (0, 0, 0)),  # W1
                pl.BlockSpec((1, hid_c), lambda b: (0, 0)),          # b1
                pl.BlockSpec((K1, hid_c, out_c), lambda b: (0, 0, 0)),  # W2
                pl.BlockSpec((1, out_c), lambda b: (0, 0)),          # b2
            ],
            out_specs=pl.BlockSpec((1, N, out_c), lambda b: (b, 0, 0)),
        ),
        compiler_params=pltpu.CompilerParams(
            dimension_semantics=("parallel",)),
    )(L_stacked, x, w1, b1, w2, b2)


# ----------------------------------------------------------------------------
# Graph preprocessing (plain JAX glue, mirrors ChebConv.get_laplacian /
# cheb_polynomial exactly)
# ----------------------------------------------------------------------------
def get_laplacian(graph, normalize=True):
    if normalize:
        d = jnp.sum(graph, axis=-1) ** (-0.5)
        D = jnp.diag(d)
        L = jnp.eye(graph.shape[0], dtype=graph.dtype) - D @ graph @ D
    else:
        D = jnp.diag(jnp.sum(graph, axis=-1))
        L = D - graph
    return L


def cheb_polynomial(laplacian, num_terms):
    """[num_terms, N, N] Chebyshev terms T_0..T_{num_terms-1} of L."""
    N = laplacian.shape[0]
    L = laplacian.astype(jnp.float32)
    terms = [jnp.eye(N, dtype=jnp.float32)]
    if num_terms > 1:
        terms.append(L)
    for _ in range(2, num_terms):
        terms.append(2.0 * (L @ terms[-1]) - terms[-2])
    return jnp.stack(terms[:num_terms], axis=0)


# ----------------------------------------------------------------------------
# Parameter init (deterministic, mirrors nn.init.xavier_normal_ / zeros_)
# ----------------------------------------------------------------------------
def _xavier_normal(key, shape):
    # shape = (K+1, 1, in_c, out_c); PyTorch fan computation for 4D tensors.
    receptive = shape[2] * shape[3]
    fan_in = shape[1] * receptive
    fan_out = shape[0] * receptive
    std = (2.0 / (fan_in + fan_out)) ** 0.5
    return std * jax.random.normal(key, shape, dtype=jnp.float32)


def init_chebnet_params(key, in_c, hid_c, out_c, K):
    k1, k2 = jax.random.split(key)
    return {
        "w1": _xavier_normal(k1, (K + 1, 1, in_c, hid_c)),
        "b1": jnp.zeros((1, 1, hid_c), jnp.float32),
        "w2": _xavier_normal(k2, (K + 1, 1, hid_c, out_c)),
        "b2": jnp.zeros((1, 1, out_c), jnp.float32),
    }


# ----------------------------------------------------------------------------
# ChebNet forward
# ----------------------------------------------------------------------------
def chebnet_forward(params, data, K):
    graph = data["graph"][0]                      # [N, N]
    flow_x = data["flow_x"]                       # [B, N, T, F]
    B, N = flow_x.shape[0], flow_x.shape[1]
    x = flow_x.reshape(B, N, -1)                  # [B, N, C_in]

    L = get_laplacian(graph, normalize=True)
    mul_L = cheb_polynomial(L, K + 1)             # [K+1, N, N]

    out = chebnet_fused(mul_L, x,
                        params["w1"][:, 0], params["b1"][0],
                        params["w2"][:, 0], params["b2"][0])
    return out[:, :, None, :]                     # [B, N, 1, out_c]


# Pure-JAX reference for a correctness check (no Pallas).
def _chebnet_ref(params, data, K):
    graph = data["graph"][0]
    flow_x = data["flow_x"]
    B, N = flow_x.shape[0], flow_x.shape[1]
    x = flow_x.reshape(B, N, -1)
    L = get_laplacian(graph, normalize=True)
    mul_L = cheb_polynomial(L, K + 1)[:, None]    # [K+1, 1, N, N]

    hp = jax.lax.Precision.HIGHEST

    def conv(inp, w, b):
        r = jnp.einsum("kbnm,bmc->kbnc",
                       jnp.broadcast_to(mul_L, (K + 1, B, N, N)), inp,
                       precision=hp)
        r = jnp.einsum("kbnc,kcd->kbnd", r, w[:, 0], precision=hp)
        return jnp.maximum(jnp.sum(r, axis=0) + b, 0.0)

    o1 = conv(x, params["w1"], params["b1"])
    o2 = conv(o1, params["w2"], params["b2"])
    return o2[:, :, None, :]


if __name__ == "__main__":
    B, N, T, in_c = 2, 16, 1, 4
    hid_c, out_c, K = 32, 8, 3

    key = jax.random.PRNGKey(0)
    k_graph, k_flow, k_params = jax.random.split(key, 3)

    # Graph: non-negative adjacency without self loops, stored as [1, N, N]
    # (forward does data['graph'][0], matching the PyTorch module).
    adj = jax.random.uniform(k_graph, (N, N), dtype=jnp.float32)
    adj = adj * (1.0 - jnp.eye(N, dtype=jnp.float32))
    graph = adj[None]                                          # [1, N, N]

    flow_x = jax.random.normal(k_flow, (B, N, T, in_c), dtype=jnp.float32)
    data = {"graph": graph, "flow_x": flow_x}

    params = init_chebnet_params(k_params, in_c, hid_c, out_c, K)

    out = chebnet_forward(params, data, K)
    out = jax.block_until_ready(out)
    assert out.shape == (B, N, 1, out_c), out.shape

    ref = jax.block_until_ready(_chebnet_ref(params, data, K))
    np.testing.assert_allclose(np.asarray(out), np.asarray(ref),
                               rtol=1e-3, atol=1e-3)

    print("KERNEL_OK")
</pallas_src>

<mosaic_0001>
module attributes {stable_mosaic.version = 11 : i64} {
  func.func @_chebnet_fused_kernel(%arg0: i32, %arg1: memref<64x16xf32, #tpu.memory_space<vmem>>, %arg2: memref<1x16x4xf32, #tpu.memory_space<vmem>>, %arg3: memref<4x4x32xf32, #tpu.memory_space<vmem>>, %arg4: memref<1x32xf32, #tpu.memory_space<vmem>>, %arg5: memref<4x32x8xf32, #tpu.memory_space<vmem>>, %arg6: memref<1x8xf32, #tpu.memory_space<vmem>>, %arg7: memref<1x16x8xf32, #tpu.memory_space<vmem>>) attributes {dimension_semantics = [#tpu.dimension_semantics<parallel>], iteration_bounds = array<i64: 2>, scalar_prefetch = 0 : i64, scratch_operands = 0 : i64, tpu.core_type = #tpu.core_type<tc>, window_params = [{pipeline_mode = #tpu.pipeline_mode<synchronous>, transform_indices = @transform_0, window_bounds = array<i64: 64, 16>}, {transform_indices = @transform_1, window_bounds = array<i64: 1, 16, 4>}, {pipeline_mode = #tpu.pipeline_mode<synchronous>, transform_indices = @transform_2, window_bounds = array<i64: 4, 4, 32>}, {pipeline_mode = #tpu.pipeline_mode<synchronous>, transform_indices = @transform_3, window_bounds = array<i64: 1, 32>}, {pipeline_mode = #tpu.pipeline_mode<synchronous>, transform_indices = @transform_4, window_bounds = array<i64: 4, 32, 8>}, {pipeline_mode = #tpu.pipeline_mode<synchronous>, transform_indices = @transform_5, window_bounds = array<i64: 1, 8>}, {transform_indices = @transform_6, window_bounds = array<i64: 1, 16, 8>}]} {
    %c0 = arith.constant 0 : index
    %c0_0 = arith.constant 0 : index
    %0 = vector.load %arg1[%c0, %c0_0] : memref<64x16xf32, #tpu.memory_space<vmem>>, vector<64x16xf32>
    %c0_1 = arith.constant 0 : index
    %c0_2 = arith.constant 0 : index
    %c0_3 = arith.constant 0 : index
    %1 = vector.load %arg2[%c0_1, %c0_2, %c0_3] : memref<1x16x4xf32, #tpu.memory_space<vmem>>, vector<1x16x4xf32>
    %2 = vector.shape_cast %1 : vector<1x16x4xf32> to vector<16x4xf32>
    %cst = arith.constant dense<0.000000e+00> : vector<64x4xf32>
    %3 = tpu.matmul %0, %2, %cst {dimension_numbers = #tpu.dot_dimension_numbers<[1], [0], [0], [1], [0, 0, 1, 1], [], []>} : vector<64x16xf32>, vector<16x4xf32>, vector<64x4xf32> -> vector<64x4xf32>
    %4 = vector.extract_strided_slice %3 {offsets = [0, 0], sizes = [16, 4], strides = [1, 1]} : vector<64x4xf32> to vector<16x4xf32>
    %c0_4 = arith.constant 0 : index
    %c0_5 = arith.constant 0 : index
    %c0_6 = arith.constant 0 : index
    %5 = vector.load %arg3[%c0_4, %c0_5, %c0_6] : memref<4x4x32xf32, #tpu.memory_space<vmem>>, vector<1x4x32xf32>
    %6 = vector.shape_cast %5 : vector<1x4x32xf32> to vector<4x32xf32>
    %cst_7 = arith.constant dense<0.000000e+00> : vector<16x32xf32>
    %7 = tpu.matmul %4, %6, %cst_7 {dimension_numbers = #tpu.dot_dimension_numbers<[1], [0], [0], [1], [0, 0, 1, 1], [], []>} : vector<16x4xf32>, vector<4x32xf32>, vector<16x32xf32> -> vector<16x32xf32>
    %8 = vector.extract_strided_slice %3 {offsets = [16, 0], sizes = [16, 4], strides = [1, 1]} : vector<64x4xf32> to vector<16x4xf32>
    %c1 = arith.constant 1 : index
    %c0_8 = arith.constant 0 : index
    %c0_9 = arith.constant 0 : index
    %9 = vector.load %arg3[%c1, %c0_8, %c0_9] : memref<4x4x32xf32, #tpu.memory_space<vmem>>, vector<1x4x32xf32>
    %10 = vector.shape_cast %9 : vector<1x4x32xf32> to vector<4x32xf32>
    %cst_10 = arith.constant dense<0.000000e+00> : vector<16x32xf32>
    %11 = tpu.matmul %8, %10, %cst_10 {dimension_numbers = #tpu.dot_dimension_numbers<[1], [0], [0], [1], [0, 0, 1, 1], [], []>} : vector<16x4xf32>, vector<4x32xf32>, vector<16x32xf32> -> vector<16x32xf32>
    %12 = arith.addf %7, %11 : vector<16x32xf32>
    %13 = vector.extract_strided_slice %3 {offsets = [32, 0], sizes = [16, 4], strides = [1, 1]} : vector<64x4xf32> to vector<16x4xf32>
    %c2 = arith.constant 2 : index
    %c0_11 = arith.constant 0 : index
    %c0_12 = arith.constant 0 : index
    %14 = vector.load %arg3[%c2, %c0_11, %c0_12] : memref<4x4x32xf32, #tpu.memory_space<vmem>>, vector<1x4x32xf32>
    %15 = vector.shape_cast %14 : vector<1x4x32xf32> to vector<4x32xf32>
    %cst_13 = arith.constant dense<0.000000e+00> : vector<16x32xf32>
    %16 = tpu.matmul %13, %15, %cst_13 {dimension_numbers = #tpu.dot_dimension_numbers<[1], [0], [0], [1], [0, 0, 1, 1], [], []>} : vector<16x4xf32>, vector<4x32xf32>, vector<16x32xf32> -> vector<16x32xf32>
    %17 = arith.addf %12, %16 : vector<16x32xf32>
    %18 = vector.extract_strided_slice %3 {offsets = [48, 0], sizes = [16, 4], strides = [1, 1]} : vector<64x4xf32> to vector<16x4xf32>
    %c3 = arith.constant 3 : index
    %c0_14 = arith.constant 0 : index
    %c0_15 = arith.constant 0 : index
    %19 = vector.load %arg3[%c3, %c0_14, %c0_15] : memref<4x4x32xf32, #tpu.memory_space<vmem>>, vector<1x4x32xf32>
    %20 = vector.shape_cast %19 : vector<1x4x32xf32> to vector<4x32xf32>
    %cst_16 = arith.constant dense<0.000000e+00> : vector<16x32xf32>
    %21 = tpu.matmul %18, %20, %cst_16 {dimension_numbers = #tpu.dot_dimension_numbers<[1], [0], [0], [1], [0, 0, 1, 1], [], []>} : vector<16x4xf32>, vector<4x32xf32>, vector<16x32xf32> -> vector<16x32xf32>
    %22 = arith.addf %17, %21 : vector<16x32xf32>
    %c0_17 = arith.constant 0 : index
    %c0_18 = arith.constant 0 : index
    %23 = vector.load %arg4[%c0_17, %c0_18] : memref<1x32xf32, #tpu.memory_space<vmem>>, vector<1x32xf32>
    %24 = vector.broadcast %23 : vector<1x32xf32> to vector<16x32xf32>
    %25 = arith.addf %22, %24 : vector<16x32xf32>
    %cst_19 = arith.constant 0.000000e+00 : f32
    %26 = vector.broadcast %cst_19 : f32 to vector<16x32xf32>
    %27 = arith.maximumf %25, %26 : vector<16x32xf32>
    %cst_20 = arith.constant dense<0.000000e+00> : vector<64x32xf32>
    %28 = tpu.matmul %0, %27, %cst_20 {dimension_numbers = #tpu.dot_dimension_numbers<[1], [0], [0], [1], [0, 0, 1, 1], [], []>} : vector<64x16xf32>, vector<16x32xf32>, vector<64x32xf32> -> vector<64x32xf32>
    %29 = vector.extract_strided_slice %28 {offsets = [0, 0], sizes = [16, 32], strides = [1, 1]} : vector<64x32xf32> to vector<16x32xf32>
    %c0_21 = arith.constant 0 : index
    %c0_22 = arith.constant 0 : index
    %c0_23 = arith.constant 0 : index
    %30 = vector.load %arg5[%c0_21, %c0_22, %c0_23] : memref<4x32x8xf32, #tpu.memory_space<vmem>>, vector<1x32x8xf32>
    %31 = vector.shape_cast %30 : vector<1x32x8xf32> to vector<32x8xf32>
    %cst_24 = arith.constant dense<0.000000e+00> : vector<16x8xf32>
    %32 = tpu.matmul %29, %31, %cst_24 {dimension_numbers = #tpu.dot_dimension_numbers<[1], [0], [0], [1], [0, 0, 1, 1], [], []>} : vector<16x32xf32>, vector<32x8xf32>, vector<16x8xf32> -> vector<16x8xf32>
    %33 = vector.extract_strided_slice %28 {offsets = [16, 0], sizes = [16, 32], strides = [1, 1]} : vector<64x32xf32> to vector<16x32xf32>
    %c1_25 = arith.constant 1 : index
    %c0_26 = arith.constant 0 : index
    %c0_27 = arith.constant 0 : index
    %34 = vector.load %arg5[%c1_25, %c0_26, %c0_27] : memref<4x32x8xf32, #tpu.memory_space<vmem>>, vector<1x32x8xf32>
    %35 = vector.shape_cast %34 : vector<1x32x8xf32> to vector<32x8xf32>
    %cst_28 = arith.constant dense<0.000000e+00> : vector<16x8xf32>
    %36 = tpu.matmul %33, %35, %cst_28 {dimension_numbers = #tpu.dot_dimension_numbers<[1], [0], [0], [1], [0, 0, 1, 1], [], []>} : vector<16x32xf32>, vector<32x8xf32>, vector<16x8xf32> -> vector<16x8xf32>
    %37 = arith.addf %32, %36 : vector<16x8xf32>
    %38 = vector.extract_strided_slice %28 {offsets = [32, 0], sizes = [16, 32], strides = [1, 1]} : vector<64x32xf32> to vector<16x32xf32>
    %c2_29 = arith.constant 2 : index
    %c0_30 = arith.constant 0 : index
    %c0_31 = arith.constant 0 : index
    %39 = vector.load %arg5[%c2_29, %c0_30, %c0_31] : memref<4x32x8xf32, #tpu.memory_space<vmem>>, vector<1x32x8xf32>
    %40 = vector.shape_cast %39 : vector<1x32x8xf32> to vector<32x8xf32>
    %cst_32 = arith.constant dense<0.000000e+00> : vector<16x8xf32>
    %41 = tpu.matmul %38, %40, %cst_32 {dimension_numbers = #tpu.dot_dimension_numbers<[1], [0], [0], [1], [0, 0, 1, 1], [], []>} : vector<16x32xf32>, vector<32x8xf32>, vector<16x8xf32> -> vector<16x8xf32>
    %42 = arith.addf %37, %41 : vector<16x8xf32>
    %43 = vector.extract_strided_slice %28 {offsets = [48, 0], sizes = [16, 32], strides = [1, 1]} : vector<64x32xf32> to vector<16x32xf32>
    %c3_33 = arith.constant 3 : index
    %c0_34 = arith.constant 0 : index
    %c0_35 = arith.constant 0 : index
    %44 = vector.load %arg5[%c3_33, %c0_34, %c0_35] : memref<4x32x8xf32, #tpu.memory_space<vmem>>, vector<1x32x8xf32>
    %45 = vector.shape_cast %44 : vector<1x32x8xf32> to vector<32x8xf32>
    %cst_36 = arith.constant dense<0.000000e+00> : vector<16x8xf32>
    %46 = tpu.matmul %43, %45, %cst_36 {dimension_numbers = #tpu.dot_dimension_numbers<[1], [0], [0], [1], [0, 0, 1, 1], [], []>} : vector<16x32xf32>, vector<32x8xf32>, vector<16x8xf32> -> vector<16x8xf32>
    %47 = arith.addf %42, %46 : vector<16x8xf32>
    %c0_37 = arith.constant 0 : index
    %c0_38 = arith.constant 0 : index
    %48 = vector.load %arg6[%c0_37, %c0_38] : memref<1x8xf32, #tpu.memory_space<vmem>>, vector<1x8xf32>
    %49 = vector.broadcast %48 : vector<1x8xf32> to vector<16x8xf32>
    %50 = arith.addf %47, %49 : vector<16x8xf32>
    %cst_39 = arith.constant 0.000000e+00 : f32
    %51 = vector.broadcast %cst_39 : f32 to vector<16x8xf32>
    %52 = arith.maximumf %50, %51 : vector<16x8xf32>
    %c0_40 = arith.constant 0 : index
    %c0_41 = arith.constant 0 : index
    %c0_42 = arith.constant 0 : index
    %53 = vector.load %arg7[%c0_40, %c0_41, %c0_42] : memref<1x16x8xf32, #tpu.memory_space<vmem>>, vector<1x16x8xf32>
    %54 = vector.shape_cast %53 : vector<1x16x8xf32> to vector<16x8xf32>
    %55 = vector.shape_cast %52 : vector<16x8xf32> to vector<1x16x8xf32>
    tpu.vector_store %arg7[%c0_40, %c0_41, %c0_42], %55 {strides = array<i32>} : memref<1x16x8xf32, #tpu.memory_space<vmem>>, vector<1x16x8xf32>,
    return
  }
  func.func @transform_0(%arg0: i32) -> (i32, i32) {
    %c0_i32 = arith.constant 0 : i32
    %c0_i32_0 = arith.constant 0 : i32
    %c0_i32_1 = arith.constant 0 : i32
    return %c0_i32, %c0_i32_0 : i32, i32
  }
  func.func @transform_1(%arg0: i32) -> (i32, i32, i32) {
    %c0_i32 = arith.constant 0 : i32
    %c0_i32_0 = arith.constant 0 : i32
    %c0_i32_1 = arith.constant 0 : i32
    return %arg0, %c0_i32, %c0_i32_0 : i32, i32, i32
  }
  func.func @transform_2(%arg0: i32) -> (i32, i32, i32) {
    %c0_i32 = arith.constant 0 : i32
    %c0_i32_0 = arith.constant 0 : i32
    %c0_i32_1 = arith.constant 0 : i32
    %c0_i32_2 = arith.constant 0 : i32
    return %c0_i32, %c0_i32_0, %c0_i32_1 : i32, i32, i32
  }
  func.func @transform_3(%arg0: i32) -> (i32, i32) {
    %c0_i32 = arith.constant 0 : i32
    %c0_i32_0 = arith.constant 0 : i32
    %c0_i32_1 = arith.constant 0 : i32
    return %c0_i32, %c0_i32_0 : i32, i32
  }
  func.func @transform_4(%arg0: i32) -> (i32, i32, i32) {
    %c0_i32 = arith.constant 0 : i32
    %c0_i32_0 = arith.constant 0 : i32
    %c0_i32_1 = arith.constant 0 : i32
    %c0_i32_2 = arith.constant 0 : i32
    return %c0_i32, %c0_i32_0, %c0_i32_1 : i32, i32, i32
  }
  func.func @transform_5(%arg0: i32) -> (i32, i32) {
    %c0_i32 = arith.constant 0 : i32
    %c0_i32_0 = arith.constant 0 : i32
    %c0_i32_1 = arith.constant 0 : i32
    return %c0_i32, %c0_i32_0 : i32, i32
  }
  func.func @transform_6(%arg0: i32) -> (i32, i32, i32) {
    %c0_i32 = arith.constant 0 : i32
    %c0_i32_0 = arith.constant 0 : i32
    %c0_i32_1 = arith.constant 0 : i32
    return %arg0, %c0_i32, %c0_i32_0 : i32, i32, i32
  }
}

</mosaic_0001>

<llo_original>
// kernel: tpu_custom_call.1
$region0: #{tpu_custom_call.1}
  #allocation0 [shape = 'u32[]', space=smem, size = 0x4, offset = 0x4, fixed_abs, tag = 'smem constant byte address 0x4 - core index']
  #allocation1 [shape = 'u32[144,128]{1,0:T(1,128)}', space=vmem, size = 0x12000, scoped, tag = 'internal scratch']
  %s0 = inlined_call_operand.vmem [shape: f32[64,16], index: 0, kind: input, shape index: {}]
  %s1 = inlined_call_operand.vmem [shape: f32[2,16,4], index: 1, kind: input, shape index: {}]
  %s2 = inlined_call_operand.vmem [shape: f32[4,4,32], index: 2, kind: input, shape index: {}]
  %s3 = inlined_call_operand.vmem [shape: f32[1,32], index: 3, kind: input, shape index: {}]
  %s4 = inlined_call_operand.vmem [shape: f32[4,32,8], index: 4, kind: input, shape index: {}]
  %s5 = inlined_call_operand.vmem [shape: f32[1,8], index: 5, kind: input, shape index: {}]
  %s6 = inlined_call_operand.vmem [shape: f32[2,16,8], index: 6, kind: output, shape index: {}]
  %s7 = sld [smem:[#allocation0]]
  $region57: #{tpu_custom_call.1} parent=0
    _
  %s9 = ssub.s32 1, %s7
  %s10 = scalar_select 0, %s9, %s7
  loop: start=0, step=1, limit=4
  $region2: #{tpu_custom_call.1} parent=0 // loop_pre_header
    _
  $region3: #{tpu_custom_call.1} parent=0 // loop_header
    %s12 = sphi 0, %s16
    %p13 = scmp.ge.s32.totalorder %s12, 4
    %s20 = sphi 0, %s20
    %s22 = sphi 0, %s20
    %s23 = sphi 0, %s22
    %s37 = sphi 0, %s23
    %s43 = sphi 0, %s45
    %s46 = sphi 0, %s43
    %s47 = sphi 0, %s46
    %s63 = sphi 0, %s47
    %s67 = sphi 0, %s67
    %s69 = sphi 0, %s67
    %s70 = sphi 0, %s69
    %s84 = sphi 0, %s70
    %s88 = sphi 0, %s88
    %s90 = sphi 0, %s88
    %s91 = sphi 0, %s90
    %s105 = sphi 0, %s91
    %s109 = sphi 0, %s109
    %s111 = sphi 0, %s109
    %s112 = sphi 0, %s111
    %s126 = sphi 0, %s112
    %s130 = sphi 0, %s130
    %s132 = sphi 0, %s130
    %s133 = sphi 0, %s132
    %s147 = sphi 0, %s133
    %s153 = sphi 0, %s155
    %s156 = sphi 0, %s153
    %s157 = sphi 0, %s156
    %s173 = sphi 0, %s157
  $region4: #{tpu_custom_call.1} parent=0 // loop_header_branch
    %15 = sbr.rel (%p13) target = $region8
  $region5: #{tpu_custom_call.1} parent=0 // loop_body
    %s17 = ssub.s32 %s12, 1
    %s18 = ssub.s32 %s12, 2
    %s19 = sadd.s32 %s12, 1
    %s21 = sadd.s32 %s20, 1
    %p24 = scmp.eq.s32.totalorder %s12, 1
    %p25 = scmp.ne.s32.totalorder %s20, %s22
    %p26 = scmp.eq.s32.totalorder %s12, 0
    %p27 = por %p25, %p26
    %p28 = scmp.ne.s32.totalorder %s20, %s22
    %p29 = scmp.eq.s32.totalorder %s17, 1
    %p30 = por %p28, %p29
    %p31 = scmp.ne.s32.totalorder %s22, %s23
    %p32 = scmp.eq.s32.totalorder %s17, 0
    %p33 = por %p31, %p32
    %p34 = scmp.ne.s32.totalorder %s22, %s23
    %p35 = scmp.eq.s32.totalorder %s18, 1
    %p36 = por %p34, %p35
    %p38 = scmp.ne.s32.totalorder %s23, %s37
    %p39 = scmp.eq.s32.totalorder %s18, 0
    %p40 = por %p38, %p39
    %s41 = ssub.s32 %s12, %s19
    %p42 = scmp.eq.s32.totalorder %s41, 0
    %s44 = sadd.s32 %s43, 1
    %s45 = scalar_select %p42, %s43, %s44
    %p48 = pneg %p42
    %p49 = scmp.eq.s32.totalorder %s12, 1
    %p50 = por %p48, %p49
    %p51 = scmp.ne.s32.totalorder %s43, %s46
    %p52 = scmp.eq.s32.totalorder %s12, 0
    %p53 = por %p51, %p52
    %p54 = scmp.ne.s32.totalorder %s43, %s46
    %p55 = scmp.eq.s32.totalorder %s17, 1
    %p56 = por %p54, %p55
    %p57 = scmp.ne.s32.totalorder %s46, %s47
    %p58 = scmp.eq.s32.totalorder %s17, 0
    %p59 = por %p57, %p58
    %p60 = scmp.ne.s32.totalorder %s46, %s47
    %p61 = scmp.eq.s32.totalorder %s18, 1
    %p62 = por %p60, %p61
    %p64 = scmp.ne.s32.totalorder %s47, %s63
    %p65 = scmp.eq.s32.totalorder %s18, 0
    %p66 = por %p64, %p65
    %s68 = sadd.s32 %s67, 1
    %p71 = scmp.eq.s32.totalorder %s12, 1
    %p72 = scmp.ne.s32.totalorder %s67, %s69
    %p73 = scmp.eq.s32.totalorder %s12, 0
    %p74 = por %p72, %p73
    %p75 = scmp.ne.s32.totalorder %s67, %s69
    %p76 = scmp.eq.s32.totalorder %s17, 1
    %p77 = por %p75, %p76
    %p78 = scmp.ne.s32.totalorder %s69, %s70
    %p79 = scmp.eq.s32.totalorder %s17, 0
    %p80 = por %p78, %p79
    %p81 = scmp.ne.s32.totalorder %s69, %s70
    %p82 = scmp.eq.s32.totalorder %s18, 1
    %p83 = por %p81, %p82
    %p85 = scmp.ne.s32.totalorder %s70, %s84
    %p86 = scmp.eq.s32.totalorder %s18, 0
    %p87 = por %p85, %p86
    %s89 = sadd.s32 %s88, 1
    %p92 = scmp.eq.s32.totalorder %s12, 1
    %p93 = scmp.ne.s32.totalorder %s88, %s90
    %p94 = scmp.eq.s32.totalorder %s12, 0
    %p95 = por %p93, %p94
    %p96 = scmp.ne.s32.totalorder %s88, %s90
    %p97 = scmp.eq.s32.totalorder %s17, 1
    %p98 = por %p96, %p97
    %p99 = scmp.ne.s32.totalorder %s90, %s91
    %p100 = scmp.eq.s32.totalorder %s17, 0
    %p101 = por %p99, %p100
    %p102 = scmp.ne.s32.totalorder %s90, %s91
    %p103 = scmp.eq.s32.totalorder %s18, 1
    %p104 = por %p102, %p103
    %p106 = scmp.ne.s32.totalorder %s91, %s105
    %p107 = scmp.eq.s32.totalorder %s18, 0
    %p108 = por %p106, %p107
    %s110 = sadd.s32 %s109, 1
    %p113 = scmp.eq.s32.totalorder %s12, 1
    %p114 = scmp.ne.s32.totalorder %s109, %s111
    %p115 = scmp.eq.s32.totalorder %s12, 0
    %p116 = por %p114, %p115
    %p117 = scmp.ne.s32.totalorder %s109, %s111
    %p118 = scmp.eq.s32.totalorder %s17, 1
    %p119 = por %p117, %p118
    %p120 = scmp.ne.s32.totalorder %s111, %s112
    %p121 = scmp.eq.s32.totalorder %s17, 0
    %p122 = por %p120, %p121
    %p123 = scmp.ne.s32.totalorder %s111, %s112
    %p124 = scmp.eq.s32.totalorder %s18, 1
    %p125 = por %p123, %p124
    %p127 = scmp.ne.s32.totalorder %s112, %s126
    %p128 = scmp.eq.s32.totalorder %s18, 0
    %p129 = por %p127, %p128
    %s131 = sadd.s32 %s130, 1
    %p134 = scmp.eq.s32.totalorder %s12, 1
    %p135 = scmp.ne.s32.totalorder %s130, %s132
    %p136 = scmp.eq.s32.totalorder %s12, 0
    %p137 = por %p135, %p136
    %p138 = scmp.ne.s32.totalorder %s130, %s132
    %p139 = scmp.eq.s32.totalorder %s17, 1
    %p140 = por %p138, %p139
    %p141 = scmp.ne.s32.totalorder %s132, %s133
    %p142 = scmp.eq.s32.totalorder %s17, 0
    %p143 = por %p141, %p142
    %p144 = scmp.ne.s32.totalorder %s132, %s133
    %p145 = scmp.eq.s32.totalorder %s18, 1
    %p146 = por %p144, %p145
    %p148 = scmp.ne.s32.totalorder %s133, %s147
    %p149 = scmp.eq.s32.totalorder %s18, 0
    %p150 = por %p148, %p149
    %s151 = ssub.s32 %s12, %s19
    %p152 = scmp.eq.s32.totalorder %s151, 0
    %s154 = sadd.s32 %s153, 1
    %s155 = scalar_select %p152, %s153, %s154
    %p158 = pneg %p152
    %p159 = scmp.eq.s32.totalorder %s12, 1
    %p160 = por %p158, %p159
    %p161 = scmp.ne.s32.totalorder %s153, %s156
    %p162 = scmp.eq.s32.totalorder %s12, 0
    %p163 = por %p161, %p162
    %p164 = scmp.ne.s32.totalorder %s153, %s156
    %p165 = scmp.eq.s32.totalorder %s17, 1
    %p166 = por %p164, %p165
    %p167 = scmp.ne.s32.totalorder %s156, %s157
    %p168 = scmp.eq.s32.totalorder %s17, 0
    %p169 = por %p167, %p168
    %p170 = scmp.ne.s32.totalorder %s156, %s157
    %p171 = scmp.eq.s32.totalorder %s18, 1
    %p172 = por %p170, %p171
    %p174 = scmp.ne.s32.totalorder %s157, %s173
    %p175 = scmp.eq.s32.totalorder %s18, 0
    %p176 = por %p174, %p175
    %p177 = scmp.le.s32.totalorder 1, %s12
    %p178 = scmp.lt.s32.totalorder %s12, 3
    %p179 = pnand %p177, %p178
    %p180 = pneg %p179
    // Predicated region
    $region9: #{tpu_custom_call.1} parent=5 // pred_check
      _
    $region10: #{tpu_custom_call.1} parent=5 // pred_check_branch
      %182 = sbr.rel (%p179) target = $region12
    $region11: #{tpu_custom_call.1} parent=5 // pred_region
      %s183 = ssub.s32 %s12, 1
      // Predicated region
      $region13: #{tpu_custom_call.1} parent=11 // pred_check
        %p184 = pneg %p33
      $region14: #{tpu_custom_call.1} parent=11 // pred_check_branch
        %186 = sbr.rel (%p184) target = $region16
      $region15: #{tpu_custom_call.1} parent=11 // pred_region
        _
      $region16: #{tpu_custom_call.1} parent=11 // pred_fallthru
        _
      // Predicated region
      $region17: #{tpu_custom_call.1} parent=11 // pred_check
        %p187 = pneg %p80
      $region18: #{tpu_custom_call.1} parent=11 // pred_check_branch
        %189 = sbr.rel (%p187) target = $region20
      $region19: #{tpu_custom_call.1} parent=11 // pred_region
        _
      $region20: #{tpu_custom_call.1} parent=11 // pred_fallthru
        _
      // Predicated region
      $region21: #{tpu_custom_call.1} parent=11 // pred_check
        %p190 = pneg %p101
      $region22: #{tpu_custom_call.1} parent=11 // pred_check_branch
        %192 = sbr.rel (%p190) target = $region24
      $region23: #{tpu_custom_call.1} parent=11 // pred_region
        _
      $region24: #{tpu_custom_call.1} parent=11 // pred_fallthru
        _
      // Predicated region
      $region25: #{tpu_custom_call.1} parent=11 // pred_check
        %p193 = pneg %p122
      $region26: #{tpu_custom_call.1} parent=11 // pred_check_branch
        %195 = sbr.rel (%p193) target = $region28
      $region27: #{tpu_custom_call.1} parent=11 // pred_region
        _
      $region28: #{tpu_custom_call.1} parent=11 // pred_fallthru
        _
      // Predicated region
      $region29: #{tpu_custom_call.1} parent=11 // pred_check
        %p196 = pneg %p143
      $region30: #{tpu_custom_call.1} parent=11 // pred_check_branch
        %198 = sbr.rel (%p196) target = $region32
      $region31: #{tpu_custom_call.1} parent=11 // pred_region
        _
      $region32: #{tpu_custom_call.1} parent=11 // pred_fallthru
        _
    $region12: #{tpu_custom_call.1} parent=5 // pred_fallthru
      _
    %p199 = scmp.lt.s32.totalorder %s12, 2
    // Predicated region
    $region33: #{tpu_custom_call.1} parent=5 // pred_check
      %p200 = pneg %p199
    $region34: #{tpu_custom_call.1} parent=5 // pred_check_branch
      %202 = sbr.rel (%p200) target = $region36
    $region35: #{tpu_custom_call.1} parent=5 // pred_region
      // Predicated region
      $region37: #{tpu_custom_call.1} parent=35 // pred_check
        %p203 = pneg %p53
      $region38: #{tpu_custom_call.1} parent=35 // pred_check_branch
        %205 = sbr.rel (%p203) target = $region40
      $region39: #{tpu_custom_call.1} parent=35 // pred_region
        %p206 = scmp.lt.s32.totalorder %s12, 1
        %s207 = scalar_select %p206, %s12, 1
        %s208 = smul.addr %s207, 2
        %s209 = smul.addr %s208, 8
        %s210 = scalar_lea.vmem %s1, %s209
      $region40: #{tpu_custom_call.1} parent=35 // pred_fallthru
        _
    $region36: #{tpu_custom_call.1} parent=5 // pred_fallthru
      _
    %p211 = scmp.le.s32.totalorder 1, %s12
    %p212 = scmp.lt.s32.totalorder %s12, 3
    %p213 = pnand %p211, %p212
    %p214 = pneg %p213
    // Predicated region
    $region41: #{tpu_custom_call.1} parent=5 // pred_check
      _
    $region42: #{tpu_custom_call.1} parent=5 // pred_check_branch
      %216 = sbr.rel (%p213) target = $region44
    $region43: #{tpu_custom_call.1} parent=5 // pred_region
      %s217 = ssub.s32 %s12, 1
      %p218 = pneg %p33
      %p219 = pneg %p30
      %p220 = scmp.lt.s32.totalorder %s17, 1
      %s221 = scalar_select %p220, %s17, 1
      %s222 = smul.addr %s221, 2
      %s223 = smul.addr %s222, 8
      %s224 = scalar_lea.vmem %s1, %s223
      %p225 = pneg %p59
      %p226 = pneg %p56
      %p227 = pneg %p80
      %p228 = pneg %p77
      %p229 = pneg %p101
      %p230 = pneg %p98
      %p231 = pneg %p122
      %p232 = pneg %p119
      %p233 = pneg %p143
      %p234 = pneg %p140
      %p235 = pneg %p169
      %p236 = pneg %p166
      %p237 = scmp.lt.s32.totalorder %s17, 1
      %s238 = scalar_select %p237, %s17, 1
      %s239 = smul.addr %s238, 2
      %s240 = smul.addr %s239, 8
      %s241 = scalar_lea.vmem %s6, %s240
      %p242 = scmp.lt.s32.totalorder %s17, 1
      %s243 = scalar_select %p242, %s17, 1
      %s244 = smul.addr %s243, 2
      %s245 = smul.addr %s244, 8
      %s246 = scalar_lea.vmem %s1, %s245
      %p247 = scmp.lt.s32.totalorder %s17, 1
      %s248 = scalar_select %p247, %s17, 1
      %s249 = smul.addr %s248, 2
      %s250 = smul.addr %s249, 8
      %s251 = scalar_lea.vmem %s6, %s250
      %v252 = vld [vmem:[%s0] sm:$0xff]
      %v253 = vld [vmem:[%s0 + $0x8] sm:$0xff]
      %v254 = vld [vmem:[%s0 + $0x10] sm:$0xff]
      %v255 = vld [vmem:[%s0 + $0x18] sm:$0xff]
      %v256 = vld [vmem:[%s0 + $0x20] sm:$0xff]
      %v257 = vld [vmem:[%s0 + $0x28] sm:$0xff]
      %v258 = vld [vmem:[%s0 + $0x30] sm:$0xff]
      %v259 = vld [vmem:[%s0 + $0x38] sm:$0xff]
      %v260 = vld [vmem:[%s246] sm:$0xff]
      %v261 = vld [vmem:[%s246 + $0x8] sm:$0xff]
      %vm262 = vcmask 130048
      %v264 = vsel %vm262, %v252, 0
      %v267 = vsel %vm262, %v253, 0
      %v270 = vsel %vm262, %v254, 0
      %v273 = vsel %vm262, %v255, 0
      %v276 = vsel %vm262, %v256, 0
      %v279 = vsel %vm262, %v257, 0
      %v282 = vsel %vm262, %v258, 0
      %v285 = vsel %vm262, %v259, 0
      %287 = vmatprep.subr.mxu0 0.0
      %288 = vmatpush1.msra.mxu0 %v260
      %289 = vmatprep.subr.mxu0 0.0
      %290 = vmatpush1.msra.mxu0 %v261
      %291 = vmatprep.subr.mxu0 0.0
      %292 = vmatpush1.msra.mxu0 0.0
      %293 = vmatprep.subr.mxu0 0.0
      %294 = vmatpush1.msra.mxu0 0.0
      %295 = vmatprep.subr.mxu0 0.0
      %296 = vmatpush1.msra.mxu0 0.0
      %297 = vmatprep.subr.mxu0 0.0
      %298 = vmatpush1.msra.mxu0 0.0
      %299 = vmatprep.subr.mxu0 0.0
      %300 = vmatpush1.msra.mxu0 0.0
      %301 = vmatprep.subr.mxu0 0.0
      %302 = vmatpush1.msra.mxu0 0.0
      %303 = vmatprep.subr.mxu0 0.0
      %304 = vmatpush1.msra.mxu0 0.0
      %305 = vmatprep.subr.mxu0 0.0
      %306 = vmatpush1.msra.mxu0 0.0
      %307 = vmatprep.subr.mxu0 0.0
      %308 = vmatpush1.msra.mxu0 0.0
      %309 = vmatprep.subr.mxu0 0.0
      %310 = vmatpush1.msra.mxu0 0.0
      %311 = vmatprep.subr.mxu0 0.0
      %312 = vmatpush1.msra.mxu0 0.0
      %313 = vmatprep.subr.mxu0 0.0
      %314 = vmatpush1.msra.mxu0 0.0
      %315 = vmatprep.subr.mxu0 0.0
      %316 = vmatpush1.msra.mxu0 0.0
      %317 = vmatprep.subr.mxu0 0.0
      %318 = vmatpush1.msra.mxu0 0.0
      %319 = vmatprep.subr.mxu0 0.0
      %320 = vmatpush1.msra.mxu0 0.0
      %321 = vmatprep.subr.mxu0 0.0
      %322 = vmatpush1.msra.mxu0 0.0
      %323 = vmatprep.subr.mxu0 0.0
      %324 = vmatpush1.msra.mxu0 0.0
      %325 = vmatprep.subr.mxu0 0.0
      %326 = vmatpush1.msra.mxu0 0.0
      %327 = vmatprep.subr.mxu0 0.0
      %328 = vmatpush1.msra.mxu0 0.0
      %329 = vmatprep.subr.mxu0 0.0
      %330 = vmatpush1.msra.mxu0 0.0
      %331 = vmatprep.subr.mxu0 0.0
      %332 = vmatpush1.msra.mxu0 0.0
      %333 = vmatprep.subr.mxu0 0.0
      %334 = vmatpush1.msra.mxu0 0.0
      %335 = vmatprep.subr.mxu0 0.0
      %336 = vmatpush1.msra.mxu0 0.0
      %337 = vmatprep.subr.mxu0 0.0
      %338 = vmatpush1.msra.mxu0 0.0
      %339 = vmatprep.subr.mxu0 0.0
      %340 = vmatpush1.msra.mxu0 0.0
      %341 = vmatprep.subr.mxu0 0.0
      %342 = vmatpush1.msra.mxu0 0.0
      %343 = vmatprep.subr.mxu0 0.0
      %344 = vmatpush1.msra.mxu0 0.0
      %345 = vmatprep.subr.mxu0 0.0
      %346 = vmatpush1.msra.mxu0 0.0
      %347 = vmatprep.subr.mxu0 0.0
      %348 = vmatpush1.msra.mxu0 0.0
      %349 = vmatprep.subr.mxu0 0.0
      %350 = vmatpush1.msra.mxu0 0.0
      %351 = vmatprep.mubr.f32.mxu0 0.0
      %352 = vmatmul.mubr.f32.gmra.mrb[0].mxu0 %v264
      %v353 = vpop.f32.mrb[0].mxu0
      %v354 = vadd.f32 0.0, %v353
      %v355 = vpop.f32.mrb[0].mxu0
      %356 = vmatprep.mubr.f32.mxu0 0.0
      %357 = vmatmul.mubr.f32.gmra.mrb[0].mxu0 %v267
      %v358 = vpop.f32.mrb[0].mxu0
      %v359 = vadd.f32 0.0, %v358
      %v360 = vpop.f32.mrb[0].mxu0
      %361 = vmatprep.mubr.f32.mxu0 0.0
      %362 = vmatmul.mubr.f32.gmra.mrb[0].mxu0 %v270
      %v363 = vpop.f32.mrb[0].mxu0
      %v364 = vadd.f32 0.0, %v363
      %v365 = vpop.f32.mrb[0].mxu0
      %366 = vmatprep.mubr.f32.mxu0 0.0
      %367 = vmatmul.mubr.f32.gmra.mrb[0].mxu0 %v273
      %v368 = vpop.f32.mrb[0].mxu0
      %v369 = vadd.f32 0.0, %v368
      %v370 = vpop.f32.mrb[0].mxu0
      %371 = vmatprep.mubr.f32.mxu0 0.0
      %372 = vmatmul.mubr.f32.gmra.mrb[0].mxu0 %v276
      %v373 = vpop.f32.mrb[0].mxu0
      %v374 = vadd.f32 0.0, %v373
      %v375 = vpop.f32.mrb[0].mxu0
      %376 = vmatprep.mubr.f32.mxu0 0.0
      %377 = vmatmul.mubr.f32.gmra.mrb[0].mxu0 %v279
      %v378 = vpop.f32.mrb[0].mxu0
      %v379 = vadd.f32 0.0, %v378
      %v380 = vpop.f32.mrb[0].mxu0
      %381 = vmatprep.mubr.f32.mxu0 0.0
      %382 = vmatmul.mubr.f32.gmra.mrb[0].mxu0 %v282
      %v383 = vpop.f32.mrb[0].mxu0
      %v384 = vadd.f32 0.0, %v383
      %v385 = vpop.f32.mrb[0].mxu0
      %386 = vmatprep.mubr.f32.mxu0 0.0
      %387 = vmatmul.mubr.f32.gmra.mrb[0].mxu0 %v285
      %v388 = vpop.f32.mrb[0].mxu0
      %v389 = vadd.f32 0.0, %v388
      %v390 = vpop.f32.mrb[0].mxu0
      %391 = vdwg.mxu0
      %v392 = vld [vmem:[%s2] sm:$0xf]
      %s393 = scalar_lea.vmem %s2, 4
      %v394 = vld [vmem:[%s393] sm:$0xf]
      %vm395 = vcmask 31744
      %v397 = vsel %vm395, %v364, 0
      %v400 = vsel %vm395, %v369, 0
      %vm402 = vcmask 1043456
      %v404 = vsel %vm402, %v394, 0
      %406 = vmatprep.subr.mxu0 0.0
      %407 = vmatpush1.msra.mxu0 %v404
      %408 = vmatprep.subr.mxu0 0.0
      %409 = vmatpush1.msra.mxu0 0.0
      %410 = vmatprep.subr.mxu0 0.0
      %411 = vmatpush1.msra.mxu0 0.0
      %412 = vmatprep.subr.mxu0 0.0
      %413 = vmatpush1.msra.mxu0 0.0
      %414 = vmatprep.subr.mxu0 0.0
      %415 = vmatpush1.msra.mxu0 0.0
      %416 = vmatprep.subr.mxu0 0.0
      %417 = vmatpush1.msra.mxu0 0.0
      %418 = vmatprep.subr.mxu0 0.0
      %419 = vmatpush1.msra.mxu0 0.0
      %420 = vmatprep.subr.mxu0 0.0
      %421 = vmatpush1.msra.mxu0 0.0
      %422 = vmatprep.subr.mxu0 0.0
      %423 = vmatpush1.msra.mxu0 0.0
      %424 = vmatprep.subr.mxu0 0.0
      %425 = vmatpush1.msra.mxu0 0.0
      %426 = vmatprep.subr.mxu0 0.0
      %427 = vmatpush1.msra.mxu0 0.0
      %428 = vmatprep.subr.mxu0 0.0
      %429 = vmatpush1.msra.mxu0 0.0
      %430 = vmatprep.subr.mxu0 0.0
      %431 = vmatpush1.msra.mxu0 0.0
      %432 = vmatprep.subr.mxu0 0.0
      %433 = vmatpush1.msra.mxu0 0.0
      %434 = vmatprep.subr.mxu0 0.0
      %435 = vmatpush1.msra.mxu0 0.0
      %436 = vmatprep.subr.mxu0 0.0
      %437 = vmatpush1.msra.mxu0 0.0
      %438 = vmatprep.subr.mxu0 0.0
      %439 = vmatpush1.msra.mxu0 0.0
      %440 = vmatprep.subr.mxu0 0.0
      %441 = vmatpush1.msra.mxu0 0.0
      %442 = vmatprep.subr.mxu0 0.0
      %443 = vmatpush1.msra.mxu0 0.0
      %444 = vmatprep.subr.mxu0 0.0
      %445 = vmatpush1.msra.mxu0 0.0
      %446 = vmatprep.subr.mxu0 0.0
      %447 = vmatpush1.msra.mxu0 0.0
      %448 = vmatprep.subr.mxu0 0.0
      %449 = vmatpush1.msra.mxu0 0.0
      %450 = vmatprep.subr.mxu0 0.0
      %451 = vmatpush1.msra.mxu0 0.0
      %452 = vmatprep.subr.mxu0 0.0
      %453 = vmatpush1.msra.mxu0 0.0
      %454 = vmatprep.subr.mxu0 0.0
      %455 = vmatpush1.msra.mxu0 0.0
      %456 = vmatprep.subr.mxu0 0.0
      %457 = vmatpush1.msra.mxu0 0.0
      %458 = vmatprep.subr.mxu0 0.0
      %459 = vmatpush1.msra.mxu0 0.0
      %460 = vmatprep.subr.mxu0 0.0
      %461 = vmatpush1.msra.mxu0 0.0
      %462 = vmatprep.subr.mxu0 0.0
      %463 = vmatpush1.msra.mxu0 0.0
      %464 = vmatprep.subr.mxu0 0.0
      %465 = vmatpush1.msra.mxu0 0.0
      %466 = vmatprep.subr.mxu0 0.0
      %467 = vmatpush1.msra.mxu0 0.0
      %468 = vmatprep.subr.mxu0 0.0
      %469 = vmatpush1.msra.mxu0 0.0
      %470 = vmatprep.mubr.f32.mxu0 0.0
      %471 = vmatmul.mubr.f32.gmra.mrb[0].mxu0 %v397
      %v472 = vpop.f32.mrb[0].mxu0
      %v473 = vadd.f32 0.0, %v472
      %v474 = vpop.f32.mrb[0].mxu0
      %475 = vmatprep.mubr.f32.mxu0 0.0
      %476 = vmatmul.mubr.f32.gmra.mrb[0].mxu0 %v400
      %v477 = vpop.f32.mrb[0].mxu0
      %v478 = vadd.f32 0.0, %v477
      %v479 = vpop.f32.mrb[0].mxu0
      %480 = vdwg.mxu0
      %v482 = vsel %vm395, %v354, 0
      %v485 = vsel %vm395, %v359, 0
      %v488 = vsel %vm402, %v392, 0
      %490 = vmatprep.subr.mxu0 0.0
      %491 = vmatpush1.msra.mxu0 %v488
      %492 = vmatprep.subr.mxu0 0.0
      %493 = vmatpush1.msra.mxu0 0.0
      %494 = vmatprep.subr.mxu0 0.0
      %495 = vmatpush1.msra.mxu0 0.0
      %496 = vmatprep.subr.mxu0 0.0
      %497 = vmatpush1.msra.mxu0 0.0
      %498 = vmatprep.subr.mxu0 0.0
      %499 = vmatpush1.msra.mxu0 0.0
      %500 = vmatprep.subr.mxu0 0.0
      %501 = vmatpush1.msra.mxu0 0.0
      %502 = vmatprep.subr.mxu0 0.0
      %503 = vmatpush1.msra.mxu0 0.0
      %504 = vmatprep.subr.mxu0 0.0
      %505 = vmatpush1.msra.mxu0 0.0
      %506 = vmatprep.subr.mxu0 0.0
      %507 = vmatpush1.msra.mxu0 0.0
      %508 = vmatprep.subr.mxu0 0.0
      %509 = vmatpush1.msra.mxu0 0.0
      %510 = vmatprep.subr.mxu0 0.0
      %511 = vmatpush1.msra.mxu0 0.0
      %512 = vmatprep.subr.mxu0 0.0
      %513 = vmatpush1.msra.mxu0 0.0
      %514 = vmatprep.subr.mxu0 0.0
      %515 = vmatpush1.msra.mxu0 0.0
      %516 = vmatprep.subr.mxu0 0.0
      %517 = vmatpush1.msra.mxu0 0.0
      %518 = vmatprep.subr.mxu0 0.0
      %519 = vmatpush1.msra.mxu0 0.0
      %520 = vmatprep.subr.mxu0 0.0
      %521 = vmatpush1.msra.mxu0 0.0
      %522 = vmatprep.subr.mxu0 0.0
      %523 = vmatpush1.msra.mxu0 0.0
      %524 = vmatprep.subr.mxu0 0.0
      %525 = vmatpush1.msra.mxu0 0.0
      %526 = vmatprep.subr.mxu0 0.0
      %527 = vmatpush1.msra.mxu0 0.0
      %528 = vmatprep.subr.mxu0 0.0
      %529 = vmatpush1.msra.mxu0 0.0
      %530 = vmatprep.subr.mxu0 0.0
      %531 = vmatpush1.msra.mxu0 0.0
      %532 = vmatprep.subr.mxu0 0.0
      %533 = vmatpush1.msra.mxu0 0.0
      %534 = vmatprep.subr.mxu0 0.0
      %535 = vmatpush1.msra.mxu0 0.0
      %536 = vmatprep.subr.mxu0 0.0
      %537 = vmatpush1.msra.mxu0 0.0
      %538 = vmatprep.subr.mxu0 0.0
      %539 = vmatpush1.msra.mxu0 0.0
      %540 = vmatprep.subr.mxu0 0.0
      %541 = vmatpush1.msra.mxu0 0.0
      %542 = vmatprep.subr.mxu0 0.0
      %543 = vmatpush1.msra.mxu0 0.0
      %544 = vmatprep.subr.mxu0 0.0
      %545 = vmatpush1.msra.mxu0 0.0
      %546 = vmatprep.subr.mxu0 0.0
      %547 = vmatpush1.msra.mxu0 0.0
      %548 = vmatprep.subr.mxu0 0.0
      %549 = vmatpush1.msra.mxu0 0.0
      %550 = vmatprep.subr.mxu0 0.0
      %551 = vmatpush1.msra.mxu0 0.0
      %552 = vmatprep.subr.mxu0 0.0
      %553 = vmatpush1.msra.mxu0 0.0
      %554 = vmatprep.mubr.f32.mxu0 0.0
      %555 = vmatmul.mubr.f32.gmra.mrb[0].mxu0 %v482
      %v556 = vpop.f32.mrb[0].mxu0
      %v557 = vadd.f32 %v473, %v556
      %v558 = vpop.f32.mrb[0].mxu0
      %559 = vmatprep.mubr.f32.mxu0 0.0
      %560 = vmatmul.mubr.f32.gmra.mrb[0].mxu0 %v485
      %v561 = vpop.f32.mrb[0].mxu0
      %v562 = vadd.f32 %v478, %v561
      %v563 = vpop.f32.mrb[0].mxu0
      %564 = vdwg.mxu0
      %s565 = scalar_lea.vmem %s2, 8
      %v566 = vld [vmem:[%s565] sm:$0xf]
      %v568 = vsel %vm395, %v374, 0
      %v571 = vsel %vm395, %v379, 0
      %v574 = vsel %vm402, %v566, 0
      %576 = vmatprep.subr.mxu0 0.0
      %577 = vmatpush1.msra.mxu0 %v574
      %578 = vmatprep.subr.mxu0 0.0
      %579 = vmatpush1.msra.mxu0 0.0
      %580 = vmatprep.subr.mxu0 0.0
      %581 = vmatpush1.msra.mxu0 0.0
      %582 = vmatprep.subr.mxu0 0.0
      %583 = vmatpush1.msra.mxu0 0.0
      %584 = vmatprep.subr.mxu0 0.0
      %585 = vmatpush1.msra.mxu0 0.0
      %586 = vmatprep.subr.mxu0 0.0
      %587 = vmatpush1.msra.mxu0 0.0
      %588 = vmatprep.subr.mxu0 0.0
      %589 = vmatpush1.msra.mxu0 0.0
      %590 = vmatprep.subr.mxu0 0.0
      %591 = vmatpush1.msra.mxu0 0.0
      %592 = vmatprep.subr.mxu0 0.0
      %593 = vmatpush1.msra.mxu0 0.0
      %594 = vmatprep.subr.mxu0 0.0
      %595 = vmatpush1.msra.mxu0 0.0
      %596 = vmatprep.subr.mxu0 0.0
      %597 = vmatpush1.msra.mxu0 0.0
      %598 = vmatprep.subr.mxu0 0.0
      %599 = vmatpush1.msra.mxu0 0.0
      %600 = vmatprep.subr.mxu0 0.0
      %601 = vmatpush1.msra.mxu0 0.0
      %602 = vmatprep.subr.mxu0 0.0
      %603 = vmatpush1.msra.mxu0 0.0
      %604 = vmatprep.subr.mxu0 0.0
      %605 = vmatpush1.msra.mxu0 0.0
      %606 = vmatprep.subr.mxu0 0.0
      %607 = vmatpush1.msra.mxu0 0.0
      %608 = vmatprep.subr.mxu0 0.0
      %609 = vmatpush1.msra.mxu0 0.0
      %610 = vmatprep.subr.mxu0 0.0
      %611 = vmatpush1.msra.mxu0 0.0
      %612 = vmatprep.subr.mxu0 0.0
      %613 = vmatpush1.msra.mxu0 0.0
      %614 = vmatprep.subr.mxu0 0.0
      %615 = vmatpush1.msra.mxu0 0.0
      %616 = vmatprep.subr.mxu0 0.0
      %617 = vmatpush1.msra.mxu0 0.0
      %618 = vmatprep.subr.mxu0 0.0
      %619 = vmatpush1.msra.mxu0 0.0
      %620 = vmatprep.subr.mxu0 0.0
      %621 = vmatpush1.msra.mxu0 0.0
      %622 = vmatprep.subr.mxu0 0.0
      %623 = vmatpush1.msra.mxu0 0.0
      %624 = vmatprep.subr.mxu0 0.0
      %625 = vmatpush1.msra.mxu0 0.0
      %626 = vmatprep.subr.mxu0 0.0
      %627 = vmatpush1.msra.mxu0 0.0
      %628 = vmatprep.subr.mxu0 0.0
      %629 = vmatpush1.msra.mxu0 0.0
      %630 = vmatprep.subr.mxu0 0.0
      %631 = vmatpush1.msra.mxu0 0.0
      %632 = vmatprep.subr.mxu0 0.0
      %633 = vmatpush1.msra.mxu0 0.0
      %634 = vmatprep.subr.mxu0 0.0
      %635 = vmatpush1.msra.mxu0 0.0
      %636 = vmatprep.subr.mxu0 0.0
      %637 = vmatpush1.msra.mxu0 0.0
      %638 = vmatprep.subr.mxu0 0.0
      %639 = vmatpush1.msra.mxu0 0.0
      %640 = vmatprep.mubr.f32.mxu0 0.0
      %641 = vmatmul.mubr.f32.gmra.mrb[0].mxu0 %v568
      %v642 = vpop.f32.mrb[0].mxu0
      %v643 = vadd.f32 0.0, %v642
      %v644 = vpop.f32.mrb[0].mxu0
      %645 = vmatprep.mubr.f32.mxu0 0.0
      %646 = vmatmul.mubr.f32.gmra.mrb[0].mxu0 %v571
      %v647 = vpop.f32.mrb[0].mxu0
      %v648 = vadd.f32 0.0, %v647
      %v649 = vpop.f32.mrb[0].mxu0
      %650 = vdwg.mxu0
      %v651 = vadd.f32 %v557, %v643
      %v652 = vadd.f32 %v562, %v648
      %s653 = scalar_lea.vmem %s2, 12
      %v654 = vld [vmem:[%s653] sm:$0xf]
      %v656 = vsel %vm395, %v384, 0
      %v659 = vsel %vm395, %v389, 0
      %v662 = vsel %vm402, %v654, 0
      %664 = vmatprep.subr.mxu0 0.0
      %665 = vmatpush1.msra.mxu0 %v662
      %666 = vmatprep.subr.mxu0 0.0
      %667 = vmatpush1.msra.mxu0 0.0
      %668 = vmatprep.subr.mxu0 0.0
      %669 = vmatpush1.msra.mxu0 0.0
      %670 = vmatprep.subr.mxu0 0.0
      %671 = vmatpush1.msra.mxu0 0.0
      %672 = vmatprep.subr.mxu0 0.0
      %673 = vmatpush1.msra.mxu0 0.0
      %674 = vmatprep.subr.mxu0 0.0
      %675 = vmatpush1.msra.mxu0 0.0
      %676 = vmatprep.subr.mxu0 0.0
      %677 = vmatpush1.msra.mxu0 0.0
      %678 = vmatprep.subr.mxu0 0.0
      %679 = vmatpush1.msra.mxu0 0.0
      %680 = vmatprep.subr.mxu0 0.0
      %681 = vmatpush1.msra.mxu0 0.0
      %682 = vmatprep.subr.mxu0 0.0
      %683 = vmatpush1.msra.mxu0 0.0
      %684 = vmatprep.subr.mxu0 0.0
      %685 = vmatpush1.msra.mxu0 0.0
      %686 = vmatprep.subr.mxu0 0.0
      %687 = vmatpush1.msra.mxu0 0.0
      %688 = vmatprep.subr.mxu0 0.0
      %689 = vmatpush1.msra.mxu0 0.0
      %690 = vmatprep.subr.mxu0 0.0
      %691 = vmatpush1.msra.mxu0 0.0
      %692 = vmatprep.subr.mxu0 0.0
      %693 = vmatpush1.msra.mxu0 0.0
      %694 = vmatprep.subr.mxu0 0.0
      %695 = vmatpush1.msra.mxu0 0.0
      %696 = vmatprep.subr.mxu0 0.0
      %697 = vmatpush1.msra.mxu0 0.0
      %698 = vmatprep.subr.mxu0 0.0
      %699 = vmatpush1.msra.mxu0 0.0
      %700 = vmatprep.subr.mxu0 0.0
      %701 = vmatpush1.msra.mxu0 0.0
      %702 = vmatprep.subr.mxu0 0.0
      %703 = vmatpush1.msra.mxu0 0.0
      %704 = vmatprep.subr.mxu0 0.0
      %705 = vmatpush1.msra.mxu0 0.0
      %706 = vmatprep.subr.mxu0 0.0
      %707 = vmatpush1.msra.mxu0 0.0
      %708 = vmatprep.subr.mxu0 0.0
      %709 = vmatpush1.msra.mxu0 0.0
      %710 = vmatprep.subr.mxu0 0.0
      %711 = vmatpush1.msra.mxu0 0.0
      %712 = vmatprep.subr.mxu0 0.0
      %713 = vmatpush1.msra.mxu0 0.0
      %714 = vmatprep.subr.mxu0 0.0
      %715 = vmatpush1.msra.mxu0 0.0
      %716 = vmatprep.subr.mxu0 0.0
      %717 = vmatpush1.msra.mxu0 0.0
      %718 = vmatprep.subr.mxu0 0.0
      %719 = vmatpush1.msra.mxu0 0.0
      %720 = vmatprep.subr.mxu0 0.0
      %721 = vmatpush1.msra.mxu0 0.0
      %722 = vmatprep.subr.mxu0 0.0
      %723 = vmatpush1.msra.mxu0 0.0
      %724 = vmatprep.subr.mxu0 0.0
      %725 = vmatpush1.msra.mxu0 0.0
      %726 = vmatprep.subr.mxu0 0.0
      %727 = vmatpush1.msra.mxu0 0.0
      %728 = vmatprep.mubr.f32.mxu0 0.0
      %729 = vmatmul.mubr.f32.gmra.mrb[0].mxu0 %v656
      %v730 = vpop.f32.mrb[0].mxu0
      %v731 = vadd.f32 0.0, %v730
      %v732 = vpop.f32.mrb[0].mxu0
      %733 = vmatprep.mubr.f32.mxu0 0.0
      %734 = vmatmul.mubr.f32.gmra.mrb[0].mxu0 %v659
      %v735 = vpop.f32.mrb[0].mxu0
      %v736 = vadd.f32 0.0, %v735
      %v737 = vpop.f32.mrb[0].mxu0
      %738 = vdwg.mxu0
      %v739 = vadd.f32 %v651, %v731
      %v740 = vadd.f32 %v652, %v736
      %v741 = vld [vmem:[%s3] sm:$0x1]
      %v743 = vlaneseq
      %v744 = vshrl.u32 %v743, 7
      %v745 = vsub.s32 0, %v744
      %v746 = vrot.slane %v741, %v745
      %v748 = vadd.f32 %v739, %v746
      %v749 = vadd.f32 %v740, %v746
      %v750 = vmax.f32 %v748, 0.0
      %v751 = vmax.f32 %v749, 0.0
      %752 = vmatprep.subr.mxu0 0.0
      %753 = vmatpush1.msra.mxu0 %v750
      %754 = vmatprep.subr.mxu0 0.0
      %755 = vmatpush1.msra.mxu0 %v751
      %756 = vmatprep.subr.mxu0 0.0
      %757 = vmatpush1.msra.mxu0 0.0
      %758 = vmatprep.subr.mxu0 0.0
      %759 = vmatpush1.msra.mxu0 0.0
      %760 = vmatprep.subr.mxu0 0.0
      %761 = vmatpush1.msra.mxu0 0.0
      %762 = vmatprep.subr.mxu0 0.0
      %763 = vmatpush1.msra.mxu0 0.0
      %764 = vmatprep.subr.mxu0 0.0
      %765 = vmatpush1.msra.mxu0 0.0
      %766 = vmatprep.subr.mxu0 0.0
      %767 = vmatpush1.msra.mxu0 0.0
      %768 = vmatprep.subr.mxu0 0.0
      %769 = vmatpush1.msra.mxu0 0.0
      %770 = vmatprep.subr.mxu0 0.0
      %771 = vmatpush1.msra.mxu0 0.0
      %772 = vmatprep.subr.mxu0 0.0
      %773 = vmatpush1.msra.mxu0 0.0
      %774 = vmatprep.subr.mxu0 0.0
      %775 = vmatpush1.msra.mxu0 0.0
      %776 = vmatprep.subr.mxu0 0.0
      %777 = vmatpush1.msra.mxu0 0.0
      %778 = vmatprep.subr.mxu0 0.0
      %779 = vmatpush1.msra.mxu0 0.0
      %780 = vmatprep.subr.mxu0 0.0
      %781 = vmatpush1.msra.mxu0 0.0
      %782 = vmatprep.subr.mxu0 0.0
      %783 = vmatpush1.msra.mxu0 0.0
      %784 = vmatprep.subr.mxu0 0.0
      %785 = vmatpush1.msra.mxu0 0.0
      %786 = vmatprep.subr.mxu0 0.0
      %787 = vmatpush1.msra.mxu0 0.0
      %788 = vmatprep.subr.mxu0 0.0
      %789 = vmatpush1.msra.mxu0 0.0
      %790 = vmatprep.subr.mxu0 0.0
      %791 = vmatpush1.msra.mxu0 0.0
      %792 = vmatprep.subr.mxu0 0.0
      %793 = vmatpush1.msra.mxu0 0.0
      %794 = vmatprep.subr.mxu0 0.0
      %795 = vmatpush1.msra.mxu0 0.0
      %796 = vmatprep.subr.mxu0 0.0
      %797 = vmatpush1.msra.mxu0 0.0
      %798 = vmatprep.subr.mxu0 0.0
      %799 = vmatpush1.msra.mxu0 0.0
      %800 = vmatprep.subr.mxu0 0.0
      %801 = vmatpush1.msra.mxu0 0.0
      %802 = vmatprep.subr.mxu0 0.0
      %803 = vmatpush1.msra.mxu0 0.0
      %804 = vmatprep.subr.mxu0 0.0
      %805 = vmatpush1.msra.mxu0 0.0
      %806 = vmatprep.subr.mxu0 0.0
      %807 = vmatpush1.msra.mxu0 0.0
      %808 = vmatprep.subr.mxu0 0.0
      %809 = vmatpush1.msra.mxu0 0.0
      %810 = vmatprep.subr.mxu0 0.0
      %811 = vmatpush1.msra.mxu0 0.0
      %812 = vmatprep.subr.mxu0 0.0
      %813 = vmatpush1.msra.mxu0 0.0
      %814 = vmatprep.subr.mxu0 0.0
      %815 = vmatpush1.msra.mxu0 0.0
      %816 = vmatprep.mubr.f32.mxu0 0.0
      %817 = vmatmul.mubr.f32.gmra.mrb[0].mxu0 %v264
      %v818 = vpop.f32.mrb[0].mxu0
      %v819 = vadd.f32 0.0, %v818
      %v820 = vpop.f32.mrb[0].mxu0
      %821 = vmatprep.mubr.f32.mxu0 0.0
      %822 = vmatmul.mubr.f32.gmra.mrb[0].mxu0 %v267
      %v823 = vpop.f32.mrb[0].mxu0
      %v824 = vadd.f32 0.0, %v823
      %v825 = vpop.f32.mrb[0].mxu0
      %826 = vmatprep.mubr.f32.mxu0 0.0
      %827 = vmatmul.mubr.f32.gmra.mrb[0].mxu0 %v270
      %v828 = vpop.f32.mrb[0].mxu0
      %v829 = vadd.f32 0.0, %v828
      %v830 = vpop.f32.mrb[0].mxu0
      %831 = vmatprep.mubr.f32.mxu0 0.0
      %832 = vmatmul.mubr.f32.gmra.mrb[0].mxu0 %v273
      %v833 = vpop.f32.mrb[0].mxu0
      %v834 = vadd.f32 0.0, %v833
      %v835 = vpop.f32.mrb[0].mxu0
      %836 = vmatprep.mubr.f32.mxu0 0.0
      %837 = vmatmul.mubr.f32.gmra.mrb[0].mxu0 %v276
      %v838 = vpop.f32.mrb[0].mxu0
      %v839 = vadd.f32 0.0, %v838
      %v840 = vpop.f32.mrb[0].mxu0
      %841 = vmatprep.mubr.f32.mxu0 0.0
      %842 = vmatmul.mubr.f32.gmra.mrb[0].mxu0 %v279
      %v843 = vpop.f32.mrb[0].mxu0
      %v844 = vadd.f32 0.0, %v843
      %v845 = vpop.f32.mrb[0].mxu0
      %846 = vmatprep.mubr.f32.mxu0 0.0
      %847 = vmatmul.mubr.f32.gmra.mrb[0].mxu0 %v282
      %v848 = vpop.f32.mrb[0].mxu0
      %v849 = vadd.f32 0.0, %v848
      %v850 = vpop.f32.mrb[0].mxu0
      %851 = vmatprep.mubr.f32.mxu0 0.0
      %852 = vmatmul.mubr.f32.gmra.mrb[0].mxu0 %v285
      %v853 = vpop.f32.mrb[0].mxu0
      %v854 = vadd.f32 0.0, %v853
      %v855 = vpop.f32.mrb[0].mxu0
      %856 = vdwg.mxu0
      %v857 = vld [vmem:[%s4] sm:$0xff]
      %v858 = vld [vmem:[%s4 + $0x8] sm:$0xff]
      %v859 = vld [vmem:[%s4 + $0x10] sm:$0xff]
      %v860 = vld [vmem:[%s4 + $0x18] sm:$0xff]
      %s861 = scalar_lea.vmem %s4, 32
      %v862 = vld [vmem:[%s861] sm:$0xff]
      %v863 = vld [vmem:[%s861 + $0x8] sm:$0xff]
      %v864 = vld [vmem:[%s861 + $0x10] sm:$0xff]
      %v865 = vld [vmem:[%s861 + $0x18] sm:$0xff]
      %vm866 = vcmask 261120
      %v868 = vsel %vm866, %v829, 0
      %v871 = vsel %vm866, %v834, 0
      %873 = vmatprep.subr.mxu0 0.0
      %874 = vmatpush1.msra.mxu0 %v862
      %875 = vmatprep.subr.mxu0 0.0
      %876 = vmatpush1.msra.mxu0 %v863
      %877 = vmatprep.subr.mxu0 0.0
      %878 = vmatpush1.msra.mxu0 %v864
      %879 = vmatprep.subr.mxu0 0.0
      %880 = vmatpush1.msra.mxu0 %v865
      %881 = vmatprep.subr.mxu0 0.0
      %882 = vmatpush1.msra.mxu0 0.0
      %883 = vmatprep.subr.mxu0 0.0
      %884 = vmatpush1.msra.mxu0 0.0
      %885 = vmatprep.subr.mxu0 0.0
      %886 = vmatpush1.msra.mxu0 0.0
      %887 = vmatprep.subr.mxu0 0.0
      %888 = vmatpush1.msra.mxu0 0.0
      %889 = vmatprep.subr.mxu0 0.0
      %890 = vmatpush1.msra.mxu0 0.0
      %891 = vmatprep.subr.mxu0 0.0
      %892 = vmatpush1.msra.mxu0 0.0
      %893 = vmatprep.subr.mxu0 0.0
      %894 = vmatpush1.msra.mxu0 0.0
      %895 = vmatprep.subr.mxu0 0.0
      %896 = vmatpush1.msra.mxu0 0.0
      %897 = vmatprep.subr.mxu0 0.0
      %898 = vmatpush1.msra.mxu0 0.0
      %899 = vmatprep.subr.mxu0 0.0
      %900 = vmatpush1.msra.mxu0 0.0
      %901 = vmatprep.subr.mxu0 0.0
      %902 = vmatpush1.msra.mxu0 0.0
      %903 = vmatprep.subr.mxu0 0.0
      %904 = vmatpush1.msra.mxu0 0.0
      %905 = vmatprep.subr.mxu0 0.0
      %906 = vmatpush1.msra.mxu0 0.0
      %907 = vmatprep.subr.mxu0 0.0
      %908 = vmatpush1.msra.mxu0 0.0
      %909 = vmatprep.subr.mxu0 0.0
      %910 = vmatpush1.msra.mxu0 0.0
      %911 = vmatprep.subr.mxu0 0.0
      %912 = vmatpush1.msra.mxu0 0.0
      %913 = vmatprep.subr.mxu0 0.0
      %914 = vmatpush1.msra.mxu0 0.0
      %915 = vmatprep.subr.mxu0 0.0
      %916 = vmatpush1.msra.mxu0 0.0
      %917 = vmatprep.subr.mxu0 0.0
      %918 = vmatpush1.msra.mxu0 0.0
      %919 = vmatprep.subr.mxu0 0.0
      %920 = vmatpush1.msra.mxu0 0.0
      %921 = vmatprep.subr.mxu0 0.0
      %922 = vmatpush1.msra.mxu0 0.0
      %923 = vmatprep.subr.mxu0 0.0
      %924 = vmatpush1.msra.mxu0 0.0
      %925 = vmatprep.subr.mxu0 0.0
      %926 = vmatpush1.msra.mxu0 0.0
      %927 = vmatprep.subr.mxu0 0.0
      %928 = vmatpush1.msra.mxu0 0.0
      %929 = vmatprep.subr.mxu0 0.0
      %930 = vmatpush1.msra.mxu0 0.0
      %931 = vmatprep.subr.mxu0 0.0
      %932 = vmatpush1.msra.mxu0 0.0
      %933 = vmatprep.subr.mxu0 0.0
      %934 = vmatpush1.msra.mxu0 0.0
      %935 = vmatprep.subr.mxu0 0.0
      %936 = vmatpush1.msra.mxu0 0.0
      %937 = vmatprep.mubr.f32.mxu0 0.0
      %938 = vmatmul.mubr.f32.gmra.mrb[0].mxu0 %v868
      %v939 = vpop.f32.mrb[0].mxu0
      %v940 = vadd.f32 0.0, %v939
      %v941 = vpop.f32.mrb[0].mxu0
      %942 = vmatprep.mubr.f32.mxu0 0.0
      %943 = vmatmul.mubr.f32.gmra.mrb[0].mxu0 %v871
      %v944 = vpop.f32.mrb[0].mxu0
      %v945 = vadd.f32 0.0, %v944
      %v946 = vpop.f32.mrb[0].mxu0
      %947 = vdwg.mxu0
      %v949 = vsel %vm866, %v819, 0
      %v952 = vsel %vm866, %v824, 0
      %954 = vmatprep.subr.mxu0 0.0
      %955 = vmatpush1.msra.mxu0 %v857
      %956 = vmatprep.subr.mxu0 0.0
      %957 = vmatpush1.msra.mxu0 %v858
      %958 = vmatprep.subr.mxu0 0.0
      %959 = vmatpush1.msra.mxu0 %v859
      %960 = vmatprep.subr.mxu0 0.0
      %961 = vmatpush1.msra.mxu0 %v860
      %962 = vmatprep.subr.mxu0 0.0
      %963 = vmatpush1.msra.mxu0 0.0
      %964 = vmatprep.subr.mxu0 0.0
      %965 = vmatpush1.msra.mxu0 0.0
      %966 = vmatprep.subr.mxu0 0.0
      %967 = vmatpush1.msra.mxu0 0.0
      %968 = vmatprep.subr.mxu0 0.0
      %969 = vmatpush1.msra.mxu0 0.0
      %970 = vmatprep.subr.mxu0 0.0
      %971 = vmatpush1.msra.mxu0 0.0
      %972 = vmatprep.subr.mxu0 0.0
      %973 = vmatpush1.msra.mxu0 0.0
      %974 = vmatprep.subr.mxu0 0.0
      %975 = vmatpush1.msra.mxu0 0.0
      %976 = vmatprep.subr.mxu0 0.0
      %977 = vmatpush1.msra.mxu0 0.0
      %978 = vmatprep.subr.mxu0 0.0
      %979 = vmatpush1.msra.mxu0 0.0
      %980 = vmatprep.subr.mxu0 0.0
      %981 = vmatpush1.msra.mxu0 0.0
      %982 = vmatprep.subr.mxu0 0.0
      %983 = vmatpush1.msra.mxu0 0.0
      %984 = vmatprep.subr.mxu0 0.0
      %985 = vmatpush1.msra.mxu0 0.0
      %986 = vmatprep.subr.mxu0 0.0
      %987 = vmatpush1.msra.mxu0 0.0
      %988 = vmatprep.subr.mxu0 0.0
      %989 = vmatpush1.msra.mxu0 0.0
      %990 = vmatprep.subr.mxu0 0.0
      %991 = vmatpush1.msra.mxu0 0.0
      %992 = vmatprep.subr.mxu0 0.0
      %993 = vmatpush1.msra.mxu0 0.0
      %994 = vmatprep.subr.mxu0 0.0
      %995 = vmatpush1.msra.mxu0 0.0
      %996 = vmatprep.subr.mxu0 0.0
      %997 = vmatpush1.msra.mxu0 0.0
      %998 = vmatprep.subr.mxu0 0.0
      %999 = vmatpush1.msra.mxu0 0.0
      %1000 = vmatprep.subr.mxu0 0.0
      %1001 = vmatpush1.msra.mxu0 0.0
      %1002 = vmatprep.subr.mxu0 0.0
      %1003 = vmatpush1.msra.mxu0 0.0
      %1004 = vmatprep.subr.mxu0 0.0
      %1005 = vmatpush1.msra.mxu0 0.0
      %1006 = vmatprep.subr.mxu0 0.0
      %1007 = vmatpush1.msra.mxu0 0.0
      %1008 = vmatprep.subr.mxu0 0.0
      %1009 = vmatpush1.msra.mxu0 0.0
      %1010 = vmatprep.subr.mxu0 0.0
      %1011 = vmatpush1.msra.mxu0 0.0
      %1012 = vmatprep.subr.mxu0 0.0
      %1013 = vmatpush1.msra.mxu0 0.0
      %1014 = vmatprep.subr.mxu0 0.0
      %1015 = vmatpush1.msra.mxu0 0.0
      %1016 = vmatprep.subr.mxu0 0.0
      %1017 = vmatpush1.msra.mxu0 0.0
      %1018 = vmatprep.mubr.f32.mxu0 0.0
      %1019 = vmatmul.mubr.f32.gmra.mrb[0].mxu0 %v949
      %v1020 = vpop.f32.mrb[0].mxu0
      %v1021 = vadd.f32 %v940, %v1020
      %v1022 = vpop.f32.mrb[0].mxu0
      %1023 = vmatprep.mubr.f32.mxu0 0.0
      %1024 = vmatmul.mubr.f32.gmra.mrb[0].mxu0 %v952
      %v1025 = vpop.f32.mrb[0].mxu0
      %v1026 = vadd.f32 %v945, %v1025
      %v1027 = vpop.f32.mrb[0].mxu0
      %1028 = vdwg.mxu0
      %s1029 = scalar_lea.vmem %s4, 64
      %v1030 = vld [vmem:[%s1029] sm:$0xff]
      %v1031 = vld [vmem:[%s1029 + $0x8] sm:$0xff]
      %v1032 = vld [vmem:[%s1029 + $0x10] sm:$0xff]
      %v1033 = vld [vmem:[%s1029 + $0x18] sm:$0xff]
      %v1035 = vsel %vm866, %v839, 0
      %v1038 = vsel %vm866, %v844, 0
      %1040 = vmatprep.subr.mxu0 0.0
      %1041 = vmatpush1.msra.mxu0 %v1030
      %1042 = vmatprep.subr.mxu0 0.0
      %1043 = vmatpush1.msra.mxu0 %v1031
      %1044 = vmatprep.subr.mxu0 0.0
      %1045 = vmatpush1.msra.mxu0 %v1032
      %1046 = vmatprep.subr.mxu0 0.0
      %1047 = vmatpush1.msra.mxu0 %v1033
      %1048 = vmatprep.subr.mxu0 0.0
      %1049 = vmatpush1.msra.mxu0 0.0
      %1050 = vmatprep.subr.mxu0 0.0
      %1051 = vmatpush1.msra.mxu0 0.0
      %1052 = vmatprep.subr.mxu0 0.0
      %1053 = vmatpush1.msra.mxu0 0.0
      %1054 = vmatprep.subr.mxu0 0.0
      %1055 = vmatpush1.msra.mxu0 0.0
      %1056 = vmatprep.subr.mxu0 0.0
      %1057 = vmatpush1.msra.mxu0 0.0
      %1058 = vmatprep.subr.mxu0 0.0
      %1059 = vmatpush1.msra.mxu0 0.0
      %1060 = vmatprep.subr.mxu0 0.0
      %1061 = vmatpush1.msra.mxu0 0.0
      %1062 = vmatprep.subr.mxu0 0.0
      %1063 = vmatpush1.msra.mxu0 0.0
      %1064 = vmatprep.subr.mxu0 0.0
      %1065 = vmatpush1.msra.mxu0 0.0
      %1066 = vmatprep.subr.mxu0 0.0
      %1067 = vmatpush1.msra.mxu0 0.0
      %1068 = vmatprep.subr.mxu0 0.0
      %1069 = vmatpush1.msra.mxu0 0.0
      %1070 = vmatprep.subr.mxu0 0.0
      %1071 = vmatpush1.msra.mxu0 0.0
      %1072 = vmatprep.subr.mxu0 0.0
      %1073 = vmatpush1.msra.mxu0 0.0
      %1074 = vmatprep.subr.mxu0 0.0
      %1075 = vmatpush1.msra.mxu0 0.0
      %1076 = vmatprep.subr.mxu0 0.0
      %1077 = vmatpush1.msra.mxu0 0.0
      %1078 = vmatprep.subr.mxu0 0.0
      %1079 = vmatpush1.msra.mxu0 0.0
      %1080 = vmatprep.subr.mxu0 0.0
      %1081 = vmatpush1.msra.mxu0 0.0
      %1082 = vmatprep.subr.mxu0 0.0
      %1083 = vmatpush1.msra.mxu0 0.0
      %1084 = vmatprep.subr.mxu0 0.0
      %1085 = vmatpush1.msra.mxu0 0.0
      %1086 = vmatprep.subr.mxu0 0.0
      %1087 = vmatpush1.msra.mxu0 0.0
      %1088 = vmatprep.subr.mxu0 0.0
      %1089 = vmatpush1.msra.mxu0 0.0
      %1090 = vmatprep.subr.mxu0 0.0
      %1091 = vmatpush1.msra.mxu0 0.0
      %1092 = vmatprep.subr.mxu0 0.0
      %1093 = vmatpush1.msra.mxu0 0.0
      %1094 = vmatprep.subr.mxu0 0.0
      %1095 = vmatpush1.msra.mxu0 0.0
      %1096 = vmatprep.subr.mxu0 0.0
      %1097 = vmatpush1.msra.mxu0 0.0
      %1098 = vmatprep.subr.mxu0 0.0
      %1099 = vmatpush1.msra.mxu0 0.0
      %1100 = vmatprep.subr.mxu0 0.0
      %1101 = vmatpush1.msra.mxu0 0.0
      %1102 = vmatprep.subr.mxu0 0.0
      %1103 = vmatpush1.msra.mxu0 0.0
      %1104 = vmatprep.mubr.f32.mxu0 0.0
      %1105 = vmatmul.mubr.f32.gmra.mrb[0].mxu0 %v1035
      %v1106 = vpop.f32.mrb[0].mxu0
      %v1107 = vadd.f32 0.0, %v1106
      %v1108 = vpop.f32.mrb[0].mxu0
      %1109 = vmatprep.mubr.f32.mxu0 0.0
      %1110 = vmatmul.mubr.f32.gmra.mrb[0].mxu0 %v1038
      %v1111 = vpop.f32.mrb[0].mxu0
      %v1112 = vadd.f32 0.0, %v1111
      %v1113 = vpop.f32.mrb[0].mxu0
      %1114 = vdwg.mxu0
      %v1115 = vadd.f32 %v1021, %v1107
      %v1116 = vadd.f32 %v1026, %v1112
      %s1117 = scalar_lea.vmem %s4, 96
      %v1118 = vld [vmem:[%s1117] sm:$0xff]
      %v1119 = vld [vmem:[%s1117 + $0x8] sm:$0xff]
      %v1120 = vld [vmem:[%s1117 + $0x10] sm:$0xff]
      %v1121 = vld [vmem:[%s1117 + $0x18] sm:$0xff]
      %v1123 = vsel %vm866, %v849, 0
      %v1126 = vsel %vm866, %v854, 0
      %1128 = vmatprep.subr.mxu0 0.0
      %1129 = vmatpush1.msra.mxu0 %v1118
      %1130 = vmatprep.subr.mxu0 0.0
      %1131 = vmatpush1.msra.mxu0 %v1119
      %1132 = vmatprep.subr.mxu0 0.0
      %1133 = vmatpush1.msra.mxu0 %v1120
      %1134 = vmatprep.subr.mxu0 0.0
      %1135 = vmatpush1.msra.mxu0 %v1121
      %1136 = vmatprep.subr.mxu0 0.0
      %1137 = vmatpush1.msra.mxu0 0.0
      %1138 = vmatprep.subr.mxu0 0.0
      %1139 = vmatpush1.msra.mxu0 0.0
      %1140 = vmatprep.subr.mxu0 0.0
      %1141 = vmatpush1.msra.mxu0 0.0
      %1142 = vmatprep.subr.mxu0 0.0
      %1143 = vmatpush1.msra.mxu0 0.0
      %1144 = vmatprep.subr.mxu0 0.0
      %1145 = vmatpush1.msra.mxu0 0.0
      %1146 = vmatprep.subr.mxu0 0.0
      %1147 = vmatpush1.msra.mxu0 0.0
      %1148 = vmatprep.subr.mxu0 0.0
      %1149 = vmatpush1.msra.mxu0 0.0
      %1150 = vmatprep.subr.mxu0 0.0
      %1151 = vmatpush1.msra.mxu0 0.0
      %1152 = vmatprep.subr.mxu0 0.0
      %1153 = vmatpush1.msra.mxu0 0.0
      %1154 = vmatprep.subr.mxu0 0.0
      %1155 = vmatpush1.msra.mxu0 0.0
      %1156 = vmatprep.subr.mxu0 0.0
      %1157 = vmatpush1.msra.mxu0 0.0
      %1158 = vmatprep.subr.mxu0 0.0
      %1159 = vmatpush1.msra.mxu0 0.0
      %1160 = vmatprep.subr.mxu0 0.0
      %1161 = vmatpush1.msra.mxu0 0.0
      %1162 = vmatprep.subr.mxu0 0.0
      %1163 = vmatpush1.msra.mxu0 0.0
      %1164 = vmatprep.subr.mxu0 0.0
      %1165 = vmatpush1.msra.mxu0 0.0
      %1166 = vmatprep.subr.mxu0 0.0
      %1167 = vmatpush1.msra.mxu0 0.0
      %1168 = vmatprep.subr.mxu0 0.0
      %1169 = vmatpush1.msra.mxu0 0.0
      %1170 = vmatprep.subr.mxu0 0.0
      %1171 = vmatpush1.msra.mxu0 0.0
      %1172 = vmatprep.subr.mxu0 0.0
      %1173 = vmatpush1.msra.mxu0 0.0
      %1174 = vmatprep.subr.mxu0 0.0
      %1175 = vmatpush1.msra.mxu0 0.0
      %1176 = vmatprep.subr.mxu0 0.0
      %1177 = vmatpush1.msra.mxu0 0.0
      %1178 = vmatprep.subr.mxu0 0.0
      %1179 = vmatpush1.msra.mxu0 0.0
      %1180 = vmatprep.subr.mxu0 0.0
      %1181 = vmatpush1.msra.mxu0 0.0
      %1182 = vmatprep.subr.mxu0 0.0
      %1183 = vmatpush1.msra.mxu0 0.0
      %1184 = vmatprep.subr.mxu0 0.0
      %1185 = vmatpush1.msra.mxu0 0.0
      %1186 = vmatprep.subr.mxu0 0.0
      %1187 = vmatpush1.msra.mxu0 0.0
      %1188 = vmatprep.subr.mxu0 0.0
      %1189 = vmatpush1.msra.mxu0 0.0
      %1190 = vmatprep.subr.mxu0 0.0
      %1191 = vmatpush1.msra.mxu0 0.0
      %1192 = vmatprep.mubr.f32.mxu0 0.0
      %1193 = vmatmul.mubr.f32.gmra.mrb[0].mxu0 %v1123
      %v1194 = vpop.f32.mrb[0].mxu0
      %v1195 = vadd.f32 0.0, %v1194
      %v1196 = vpop.f32.mrb[0].mxu0
      %1197 = vmatprep.mubr.f32.mxu0 0.0
      %1198 = vmatmul.mubr.f32.gmra.mrb[0].mxu0 %v1126
      %v1199 = vpop.f32.mrb[0].mxu0
      %v1200 = vadd.f32 0.0, %v1199
      %v1201 = vpop.f32.mrb[0].mxu0
      %1202 = vdwg.mxu0
      %v1203 = vadd.f32 %v1115, %v1195
      %v1204 = vadd.f32 %v1116, %v1200
      %v1205 = vld [vmem:[%s5] sm:$0x1]
      %v1207 = vlaneseq
      %v1208 = vshrl.u32 %v1207, 7
      %v1209 = vsub.s32 0, %v1208
      %v1210 = vrot.slane %v1205, %v1209
      %v1212 = vadd.f32 %v1203, %v1210
      %v1213 = vadd.f32 %v1204, %v1210
      %v1214 = vmax.f32 %v1212, 0.0
      %v1215 = vmax.f32 %v1213, 0.0
      %vm1216 = vcmask 64512
      %1217 = vst.msk [vmem:[%s251] sm:$0xff] %vm1216, %v1214
      %1218 = vst.msk [vmem:[%s251 + $0x8] sm:$0xff] %vm1216, %v1215
      %p1219 = scmp.lt.s32.totalorder %s17, 1
      %s1220 = scalar_select %p1219, %s17, 1
      %s1221 = smul.addr %s1220, 2
      %s1222 = smul.addr %s1221, 8
      %s1223 = scalar_lea.vmem %s6, %s1222
      // Predicated region
      $region45: #{tpu_custom_call.1} parent=43 // pred_check
        %p1224 = pneg %p166
      $region46: #{tpu_custom_call.1} parent=43 // pred_check_branch
        %1226 = sbr.rel (%p1224) target = $region48
      $region47: #{tpu_custom_call.1} parent=43 // pred_region
        _
      $region48: #{tpu_custom_call.1} parent=43 // pred_fallthru
        _
    $region44: #{tpu_custom_call.1} parent=5 // pred_fallthru
      _
    %p1227 = scmp.le.s32.totalorder 2, %s12
    // Predicated region
    $region49: #{tpu_custom_call.1} parent=5 // pred_check
      %p1228 = pneg %p1227
    $region50: #{tpu_custom_call.1} parent=5 // pred_check_branch
      %1230 = sbr.rel (%p1228) target = $region52
    $region51: #{tpu_custom_call.1} parent=5 // pred_region
      %s1231 = ssub.s32 %s12, 2
      // Predicated region
      $region53: #{tpu_custom_call.1} parent=51 // pred_check
        %p1232 = pneg %p172
      $region54: #{tpu_custom_call.1} parent=51 // pred_check_branch
        %1234 = sbr.rel (%p1232) target = $region56
      $region55: #{tpu_custom_call.1} parent=51 // pred_region
        %p1235 = scmp.lt.s32.totalorder %s18, 1
        %s1236 = scalar_select %p1235, %s18, 1
        %s1237 = smul.addr %s1236, 2
        %s1238 = smul.addr %s1237, 8
        %s1239 = scalar_lea.vmem %s6, %s1238
      $region56: #{tpu_custom_call.1} parent=51 // pred_fallthru
        _
    $region52: #{tpu_custom_call.1} parent=5 // pred_fallthru
      _
  $region6: #{tpu_custom_call.1} parent=0 // loop_footer
    %s16 = sadd.s32 1, %s12
  $region7: #{tpu_custom_call.1} parent=0 // loop_footer_branch
    %11 = sbr.rel target = $region3
  $region8: #{tpu_custom_call.1} parent=0 // loop_exit
    _

</llo_original>
